<compile_context>
chip_gen: v7x
topology: tpu7x:2x2x1
jax: 0.10.0
libtpu: 0.0.40
codegen_flags: <defaults>
</compile_context>

<pallas_src>
import functools

import jax
import jax.numpy as jnp
from jax.experimental import pallas as pl
from jax.experimental.pallas import tpu as pltpu


LANE = 128


def _round_up(x, m):
    return ((x + m - 1) // m) * m


def _largest_divisor_leq(n, cap):
    cap = max(1, min(int(n), int(cap)))
    for d in range(cap, 0, -1):
        if n % d == 0:
            return d
    return 1


def _tpu_vmem_bytes():
    # Per-generation tiling is derived from VMEM capacity; fall back to 128 MiB.
    try:
        return int(pltpu.get_tpu_info().vmem_capacity_bytes)
    except Exception:
        return 128 * 1024 * 1024


# ----------------------------------------------------------------------------------
# Plain-JAX glue: sampling & grouping.
# TODO(synk): farthest_point_sample / query_ball_point / index_points are
# data-dependent gathers + a sort with no clean Pallas equivalent; kept in plain JAX.
# torch uses torch.randint for the FPS seed; here it comes from an explicit PRNG key.
# ----------------------------------------------------------------------------------
def square_distance(src, dst):
    dist = -2.0 * jnp.matmul(src, jnp.swapaxes(dst, 1, 2))
    dist = dist + jnp.sum(src ** 2, -1)[:, :, None]
    dist = dist + jnp.sum(dst ** 2, -1)[:, None, :]
    return dist


def farthest_point_sample(xyz, npoint, key):
    B, N, _ = xyz.shape
    farthest = jax.random.randint(key, (B,), 0, N, dtype=jnp.int32)
    distance = jnp.full((B, N), 1e10, dtype=xyz.dtype)
    centroids = jnp.zeros((B, npoint), dtype=jnp.int32)
    batch_idx = jnp.arange(B)

    def body(i, state):
        centroids, distance, farthest = state
        centroids = centroids.at[:, i].set(farthest)
        centroid = xyz[batch_idx, farthest][:, None, :]
        dist = jnp.sum((xyz - centroid) ** 2, -1)
        distance = jnp.minimum(distance, dist)
        farthest = jnp.argmax(distance, axis=-1).astype(jnp.int32)
        return centroids, distance, farthest

    centroids, _, _ = jax.lax.fori_loop(0, npoint, body, (centroids, distance, farthest))
    return centroids


def index_points_2d(points, idx):
    return jnp.take_along_axis(points, idx[:, :, None], axis=1)


def index_points_3d(points, idx):
    # points [B,N,C], idx [B,K,S] -> [B,K,S,C]
    return jax.vmap(lambda p, i: p[i])(points, idx)


def query_ball_point(radius, nsample, xyz, new_xyz):
    B, N, _ = xyz.shape
    S = new_xyz.shape[1]
    if nsample > N:
        raise ValueError("nsample should not be greater than the number of points in xyz")
    group_idx = jnp.broadcast_to(jnp.arange(N, dtype=jnp.int32), (B, S, N))
    sqrdists = square_distance(new_xyz, xyz)
    group_idx = jnp.where(sqrdists > radius ** 2, N - 1, group_idx)
    group_idx = jnp.sort(group_idx, axis=-1)[:, :, :nsample]
    group_first = jnp.broadcast_to(group_idx[:, :, :1], group_idx.shape)
    group_idx = jnp.where(group_idx == N - 1, group_first, group_idx)
    return group_idx


def sample_and_group(npoint, radius, nsample, xyz, points, key):
    # K-leading layout [B, K, S, C] so the kernel's max over K is a leading-axis
    # (VPU) running max.  No concat of xyz/point features — fed separately.
    fps_idx = farthest_point_sample(xyz, npoint, key)               # [B,S]
    new_xyz = index_points_2d(xyz, fps_idx)                         # [B,S,3]
    idx = query_ball_point(radius, nsample, xyz, new_xyz)           # [B,S,K]
    idx_t = jnp.swapaxes(idx, 1, 2)                                 # [B,K,S]
    grouped_xyz = index_points_3d(xyz, idx_t)                       # [B,K,S,3]
    grouped_xyz_norm = grouped_xyz - new_xyz[:, None, :, :]
    grouped_points = index_points_3d(points, idx_t) if points is not None else None
    return new_xyz, grouped_xyz_norm, grouped_points


def sample_and_group_all(xyz, points):
    B, N, C = xyz.shape
    new_xyz = jnp.zeros((B, 1, C), dtype=xyz.dtype)
    grouped_xyz = xyz[:, :, None, :]                                # [B,N,1,3]  (K=N, S=1)
    grouped_points = points[:, :, None, :] if points is not None else None
    return new_xyz, grouped_xyz, grouped_points


# ----------------------------------------------------------------------------------
# Pallas kernel: fused (1x1 conv + folded BN) MLP + ReLU + running max over nsample.
# ----------------------------------------------------------------------------------
def _mlp_max_kernel(n_layers, has_x2, k_sub, *refs):
    p = 0
    x1_ref = refs[p]; p += 1                       # (1, k_chunk, tile_s, C1) f32
    x2_ref = None
    if has_x2:
        x2_ref = refs[p]; p += 1                   # (1, k_chunk, tile_s, C2) f32
    w0a_ref = refs[p]; p += 1                      # (C1, C0_p) bf16
    w0b_ref = None
    if has_x2:
        w0b_ref = refs[p]; p += 1                  # (C2, C0_p) bf16
    b0_ref = refs[p]; p += 1                       # (1, C0_p) f32
    tail = []
    for _ in range(n_layers - 1):
        tail.append((refs[p], refs[p + 1])); p += 2
    o_ref = refs[p]                                # (1, tile_s, C_last_p) f32

    _, k_chunk, tile_s, c1 = x1_ref.shape
    c_out_p = o_ref.shape[-1]
    rows = k_sub * tile_s
    n_sub = k_chunk // k_sub
    kc = pl.program_id(2)

    # Output block is resident across the kc (reduction) axis: accumulate the
    # running max directly into o_ref.  ReLU outputs are >= 0, so zeros are a
    # valid identity for the max.
    @pl.when(kc == 0)
    def _init():
        o_ref[0] = jnp.zeros((tile_s, c_out_p), jnp.float32)

    # Hoist (small) weights / biases out of the sub-block loop.
    w0a = w0a_ref[...]
    w0b = w0b_ref[...] if has_x2 else None
    b0 = b0_ref[...]
    wbs = [(w_ref[...], b_ref[...]) for (w_ref, b_ref) in tail]

    def _l0_term(x_blk, w, c):
        # x_blk: (k_sub, tile_s, c) f32 slab straight from HBM (no host pad/cast).
        # tile_s % 8 == 0 -> the sublane merge below is a layout no-op.
        xb = x_blk.reshape(rows, c).astype(jnp.bfloat16)
        if c <= 8:
            # Tiny contraction (xyz=3, small point features): VPU broadcast-FMA
            # (f32 accumulate) instead of a badly underfilled MXU pass.
            wf = w.astype(jnp.float32)
            y = xb[:, 0:1].astype(jnp.float32) * wf[0:1, :]
            for cc in range(1, c):
                y = y + xb[:, cc:cc + 1].astype(jnp.float32) * wf[cc:cc + 1, :]
            return y
        return jnp.dot(xb, w, preferred_element_type=jnp.float32)

    def compute(x1_blk, x2_blk, m):
        y = _l0_term(x1_blk, w0a, c1)
        if has_x2:
            y = y + _l0_term(x2_blk, w0b, x2_ref.shape[-1])
        y = jnp.maximum(y + b0, 0.0)
        for (w, b) in wbs:                          # padded-to-128 contractions
            y = jnp.dot(y.astype(jnp.bfloat16), w, preferred_element_type=jnp.float32) + b
            y = jnp.maximum(y, 0.0)
        yk = y.reshape(k_sub, tile_s, c_out_p)
        # Leading-axis max -> plain VPU elementwise max across vregs (no XLU).
        return jnp.maximum(m, jnp.max(yk, axis=0))

    if n_sub == 1:
        o_ref[0] = compute(x1_ref[0], x2_ref[0] if has_x2 else None, o_ref[0])
    else:
        # Sub-block the rows so per-layer f32 intermediates stay ~rows_cap * C.
        def loop_body(i, m):
            start = pl.multiple_of(i * k_sub, k_sub)
            x1_blk = x1_ref[0, pl.ds(start, k_sub)]
            x2_blk = x2_ref[0, pl.ds(start, k_sub)] if has_x2 else None
            return compute(x1_blk, x2_blk, m)

        o_ref[0] = jax.lax.fori_loop(0, n_sub, loop_body, o_ref[0])


def mlp_max_pallas(x1, x2, folded_w, folded_b, *,
                   tile_s_cap=None, k_chunk_cap=None, rows_cap=None):
    """x1: [B,K,S,3] f32 (grouped xyz, K leading); x2: [B,K,S,D] f32 or None.
    folded_w[i]: (Cin_i, Cout_i) f32; folded_b[i]: (1, Cout_i) f32.
    Returns max over K of relu(MLP(concat(x1,x2))) as [B, S, Cout_last] f32."""
    B, K, S, C1 = x1.shape
    has_x2 = x2 is not None
    C2 = x2.shape[-1] if has_x2 else 0
    n_layers = len(folded_w)
    assert folded_w[0].shape[0] == C1 + C2

    vmem_cap = _tpu_vmem_bytes()
    big = vmem_cap >= 96 * 2**20            # v5e/v6e (128 MiB) vs v7x (64 MiB)

    # ---- tiling (re-derived per TPU generation) ----
    if tile_s_cap is None:
        tile_s_cap = 256 if big else 128
    tile_s = min(int(tile_s_cap), _round_up(S, 8))
    tile_s = max(8, (tile_s // 8) * 8)      # multiple of 8 -> in-kernel reshapes are no-ops
    s_pad = _round_up(S, tile_s)
    n_s = s_pad // tile_s

    if k_chunk_cap is None:
        in_budget = (8 if big else 4) * 2**20      # per input buffer (pipeline double-buffers)
        k_chunk_cap = max(1, in_budget // max(1, tile_s * (C1 + C2) * 4))
    k_chunk = _largest_divisor_leq(K, k_chunk_cap)
    n_kc = K // k_chunk

    if rows_cap is None:
        rows_cap = 2048 if big else 1024            # bounds rows*C*4B f32 intermediates
    k_sub = _largest_divisor_leq(k_chunk, max(1, int(rows_cap) // tile_s))

    # ---- weights: natural contraction for layer 0, lane-padded outputs (zeros are
    #      inert through relu+max); weights in bf16 for the MXU, biases in f32. ----
    ws, bs = [], []
    last_p = None
    for li, (w, b) in enumerate(zip(folded_w, folded_b)):
        ci, co = w.shape
        co_p = _round_up(co, LANE)
        if li == 0:
            w_p = jnp.zeros((ci, co_p), jnp.float32).at[:, :co].set(w)
        else:
            w_p = jnp.zeros((last_p, co_p), jnp.float32).at[:ci, :co].set(w)
        ws.append(w_p.astype(jnp.bfloat16))
        bs.append(jnp.zeros((1, co_p), jnp.float32).at[:, :co].set(b))
        last_p = co_p
    c_last = folded_w[-1].shape[1]
    c_last_p = last_p

    # Split the layer-0 weight so x1/x2 never need to be concatenated in HBM.
    w0a = ws[0][:C1]
    w0b = ws[0][C1:] if has_x2 else None

    # Pad S (rows) only; channels stay natural; dtype stays f32 (cast in-kernel).
    if s_pad != S:
        x1 = jnp.pad(x1, ((0, 0), (0, 0), (0, s_pad - S), (0, 0)))
        if has_x2:
            x2 = jnp.pad(x2, ((0, 0), (0, 0), (0, s_pad - S), (0, 0)))

    grid = (B, n_s, n_kc)

    x_map = lambda b, s, kc: (b, kc, s, 0)
    const_map2 = lambda b, s, kc: (0, 0)

    in_specs = [pl.BlockSpec((1, k_chunk, tile_s, C1), x_map)]
    args = [x1]
    if has_x2:
        in_specs.append(pl.BlockSpec((1, k_chunk, tile_s, C2), x_map))
        args.append(x2)
    in_specs.append(pl.BlockSpec(w0a.shape, const_map2)); args.append(w0a)
    if has_x2:
        in_specs.append(pl.BlockSpec(w0b.shape, const_map2)); args.append(w0b)
    in_specs.append(pl.BlockSpec(bs[0].shape, const_map2)); args.append(bs[0])
    for w_p, b_p in zip(ws[1:], bs[1:]):
        in_specs.append(pl.BlockSpec(w_p.shape, const_map2)); args.append(w_p)
        in_specs.append(pl.BlockSpec(b_p.shape, const_map2)); args.append(b_p)

    out_spec = pl.BlockSpec((1, tile_s, c_last_p), lambda b, s, kc: (b, s, 0))

    flops = 2 * B * s_pad * K * sum(int(w.shape[0]) * int(w.shape[1]) for w in folded_w)
    bytes_accessed = (int(x1.size) * 4 + (int(x2.size) * 4 if has_x2 else 0)
                      + B * s_pad * c_last_p * 4
                      + sum(int(w.size) * 2 for w in ws)
                      + sum(int(b.size) * 4 for b in bs))

    vmem_limit = int(max(32 * 2**20, min(vmem_cap * 3 // 4, 96 * 2**20)))
    kernel = functools.partial(_mlp_max_kernel, n_layers, has_x2, k_sub)

    out = pl.pallas_call(
        kernel,
        out_shape=jax.ShapeDtypeStruct((B, s_pad, c_last_p), jnp.float32),
        grid_spec=pltpu.PrefetchScalarGridSpec(
            num_scalar_prefetch=0,
            grid=grid,
            in_specs=in_specs,
            out_specs=out_spec),
        compiler_params=pltpu.CompilerParams(
            dimension_semantics=("parallel", "parallel", "arbitrary"),
            vmem_limit_bytes=vmem_limit),
        cost_estimate=pl.CostEstimate(flops=int(flops), transcendentals=0,
                                      bytes_accessed=int(bytes_accessed)),
    )(*args)

    return out[:, :S, :c_last]


# ----------------------------------------------------------------------------------
# Module wrapper
# ----------------------------------------------------------------------------------
def make_params(in_channel, mlp, key):
    """Deterministic Conv2d(1x1) + BatchNorm2d params, BN folded for eval mode."""
    # TODO(synk): BN is folded in eval mode (running stats); train-mode batch
    # statistics would need a cross-grid reduction per layer and is not implemented.
    eps = 1e-5
    folded_w, folded_b = [], []
    last = in_channel
    for out_c in mlp:
        key, kw, kb = jax.random.split(key, 3)
        conv_w = jax.random.normal(kw, (out_c, last), dtype=jnp.float32) * 0.1
        conv_b = jax.random.normal(kb, (out_c,), dtype=jnp.float32) * 0.1
        gamma = 1.0 + 0.05 * jnp.arange(out_c, dtype=jnp.float32)
        beta = 0.01 * jnp.arange(out_c, dtype=jnp.float32)
        running_mean = 0.02 * jnp.arange(out_c, dtype=jnp.float32)
        running_var = 1.0 + 0.03 * jnp.arange(out_c, dtype=jnp.float32)
        scale = gamma / jnp.sqrt(running_var + eps)
        folded_w.append((conv_w * scale[:, None]).T)                        # (C_in, C_out)
        folded_b.append(((conv_b - running_mean) * scale + beta)[None, :])  # (1, C_out)
        last = out_c
    return folded_w, folded_b


def pointnet_set_abstraction_forward(xyz, points, folded_w, folded_b,
                                     npoint, radius, nsample, group_all, fps_key,
                                     tile_s_cap=None, k_chunk_cap=None, rows_cap=None,
                                     return_grouped=False):
    """xyz: [B, 3, N]; points: [B, D, N] or None (PyTorch channel-first convention)."""
    xyz_t = jnp.transpose(xyz, (0, 2, 1))
    points_t = jnp.transpose(points, (0, 2, 1)) if points is not None else None

    if group_all:
        new_xyz, x1, x2 = sample_and_group_all(xyz_t, points_t)
    else:
        new_xyz, x1, x2 = sample_and_group(npoint, radius, nsample, xyz_t, points_t, fps_key)

    feat = mlp_max_pallas(x1, x2, folded_w, folded_b,
                          tile_s_cap=tile_s_cap, k_chunk_cap=k_chunk_cap,
                          rows_cap=rows_cap)                                # [B,S,C_out]

    new_xyz_out = jnp.transpose(new_xyz, (0, 2, 1))                         # [B, 3, S]
    # TODO(synk): downstream consumers wanting [B,S,C] can take `feat` directly and
    # skip this extra HBM read+write; kept for PyTorch channel-first API parity.
    new_points_out = jnp.transpose(feat, (0, 2, 1))                         # [B, C_out, S]
    if return_grouped:
        return new_xyz_out, new_points_out, (x1, x2)
    return new_xyz_out, new_points_out


def reference_mlp_max(x1, x2, folded_w, folded_b):
    """Pure-JAX reference matching the kernel numerics (bf16 MXU inputs, f32 acc)."""
    g = x1 if x2 is None else jnp.concatenate([x1, x2], axis=-1)            # [B,K,S,Cin]
    h = g.astype(jnp.bfloat16)
    n = len(folded_w)
    for i, (w, b) in enumerate(zip(folded_w, folded_b)):
        y = jnp.einsum("bksc,co->bkso", h, w.astype(jnp.bfloat16),
                       preferred_element_type=jnp.float32) + b
        y = jnp.maximum(y, 0.0)
        h = y.astype(jnp.bfloat16) if i < n - 1 else y
    return jnp.max(h, axis=1)                                               # [B,S,C_out]


if __name__ == "__main__":
    key = jax.random.PRNGKey(0)

    def run_case(B, N, D, npoint, radius, nsample, mlp, group_all, key,
                 tile_s_cap=None, k_chunk_cap=None, rows_cap=None):
        in_channel = 3 + D
        key, kx, kp, kf, kparam = jax.random.split(key, 5)
        xyz = jax.random.uniform(kx, (B, 3, N), dtype=jnp.float32)
        points = jax.random.normal(kp, (B, D, N), dtype=jnp.float32) if D > 0 else None
        folded_w, folded_b = make_params(in_channel, mlp, kparam)

        new_xyz_out, new_points_out, (x1, x2) = pointnet_set_abstraction_forward(
            xyz, points, folded_w, folded_b, npoint, radius, nsample, group_all, kf,
            tile_s_cap=tile_s_cap, k_chunk_cap=k_chunk_cap, rows_cap=rows_cap,
            return_grouped=True)
        new_xyz_out = jax.block_until_ready(new_xyz_out)
        new_points_out = jax.block_until_ready(new_points_out)

        S = 1 if group_all else npoint
        assert new_xyz_out.shape == (B, 3, S)
        assert new_points_out.shape == (B, mlp[-1], S)

        ref = reference_mlp_max(x1, x2, folded_w, folded_b)                 # [B,S,C_out]
        got = jnp.transpose(new_points_out, (0, 2, 1))
        assert jnp.allclose(got, ref, atol=2e-3, rtol=2e-3), "mismatch vs reference"
        return key

    # PointNetSetAbstraction(npoint=8, radius=0.6, nsample=8, in_channel=3+5,
    #                        mlp=[16, 32], group_all=False)
    key = run_case(B=2, N=16, D=5, npoint=8, radius=0.6, nsample=8,
                   mlp=[16, 32], group_all=False, key=key)
    # Exercise S padding + multiple S tiles + kc-axis accumulation + the in-kernel
    # row sub-block loop (forced small caps).
    key = run_case(B=2, N=32, D=5, npoint=12, radius=0.8, nsample=8,
                   mlp=[16, 32], group_all=False, key=key,
                   tile_s_cap=8, k_chunk_cap=4, rows_cap=8)
    # group_all path (S=1) with points=None (single-input branch).
    key = run_case(B=2, N=16, D=0, npoint=1, radius=1.0, nsample=4,
                   mlp=[8, 16], group_all=True, key=key)

    print("KERNEL_OK")
</pallas_src>

<mosaic_0001>
module attributes {stable_mosaic.version = 11 : i64} {
  func.func @_mlp_max_kernel(%arg0: i32, %arg1: i32, %arg2: i32, %arg3: memref<1x8x8x3xf32, #tpu.memory_space<vmem>>, %arg4: memref<1x8x8x5xf32, #tpu.memory_space<vmem>>, %arg5: memref<3x128xbf16, #tpu.memory_space<vmem>>, %arg6: memref<5x128xbf16, #tpu.memory_space<vmem>>, %arg7: memref<1x128xf32, #tpu.memory_space<vmem>>, %arg8: memref<128x128xbf16, #tpu.memory_space<vmem>>, %arg9: memref<1x128xf32, #tpu.memory_space<vmem>>, %arg10: memref<1x8x128xf32, #tpu.memory_space<vmem>>) attributes {dimension_semantics = [#tpu.dimension_semantics<parallel>, #tpu.dimension_semantics<parallel>, #tpu.dimension_semantics<arbitrary>], iteration_bounds = array<i64: 2, 1, 1>, scalar_prefetch = 0 : i64, scratch_operands = 0 : i64, tpu.core_type = #tpu.core_type<tc>, window_params = [{transform_indices = @transform_0, window_bounds = array<i64: 1, 8, 8, 3>}, {transform_indices = @transform_1, window_bounds = array<i64: 1, 8, 8, 5>}, {pipeline_mode = #tpu.pipeline_mode<synchronous>, transform_indices = @transform_2, window_bounds = array<i64: 3, 128>}, {pipeline_mode = #tpu.pipeline_mode<synchronous>, transform_indices = @transform_3, window_bounds = array<i64: 5, 128>}, {pipeline_mode = #tpu.pipeline_mode<synchronous>, transform_indices = @transform_4, window_bounds = array<i64: 1, 128>}, {pipeline_mode = #tpu.pipeline_mode<synchronous>, transform_indices = @transform_5, window_bounds = array<i64: 128, 128>}, {pipeline_mode = #tpu.pipeline_mode<synchronous>, transform_indices = @transform_6, window_bounds = array<i64: 1, 128>}, {transform_indices = @transform_7, window_bounds = array<i64: 1, 8, 128>}]} {
    %c0_i32 = arith.constant 0 : i32
    %0 = arith.cmpi eq, %arg2, %c0_i32 : i32
    %1 = arith.extui %0 : i1 to i32
    %c0_i32_0 = arith.constant 0 : i32
    %2 = arith.cmpi ne, %1, %c0_i32_0 : i32
    scf.if %2 {
      %cst_27 = arith.constant 0.000000e+00 : f32
      %91 = vector.broadcast %cst_27 : f32 to vector<8x128xf32>
      %c0_28 = arith.constant 0 : index
      %c0_29 = arith.constant 0 : index
      %c0_30 = arith.constant 0 : index
      %92 = vector.load %arg10[%c0_28, %c0_29, %c0_30] : memref<1x8x128xf32, #tpu.memory_space<vmem>>, vector<1x8x128xf32>
      %93 = vector.shape_cast %92 : vector<1x8x128xf32> to vector<8x128xf32>
      %94 = vector.shape_cast %91 : vector<8x128xf32> to vector<1x8x128xf32>
      tpu.vector_store %arg10[%c0_28, %c0_29, %c0_30], %94 {strides = array<i32>} : memref<1x8x128xf32, #tpu.memory_space<vmem>>, vector<1x8x128xf32>,
    } else {
    }
    %c0 = arith.constant 0 : index
    %c0_1 = arith.constant 0 : index
    %3 = vector.load %arg5[%c0, %c0_1] : memref<3x128xbf16, #tpu.memory_space<vmem>>, vector<3x128xbf16>
    %c0_2 = arith.constant 0 : index
    %c0_3 = arith.constant 0 : index
    %4 = vector.load %arg6[%c0_2, %c0_3] : memref<5x128xbf16, #tpu.memory_space<vmem>>, vector<5x128xbf16>
    %c0_4 = arith.constant 0 : index
    %c0_5 = arith.constant 0 : index
    %5 = vector.load %arg7[%c0_4, %c0_5] : memref<1x128xf32, #tpu.memory_space<vmem>>, vector<1x128xf32>
    %c0_6 = arith.constant 0 : index
    %c0_7 = arith.constant 0 : index
    %6 = vector.load %arg8[%c0_6, %c0_7] : memref<128x128xbf16, #tpu.memory_space<vmem>>, vector<128x128xbf16>
    %c0_8 = arith.constant 0 : index
    %c0_9 = arith.constant 0 : index
    %7 = vector.load %arg9[%c0_8, %c0_9] : memref<1x128xf32, #tpu.memory_space<vmem>>, vector<1x128xf32>
    %c0_10 = arith.constant 0 : index
    %c0_11 = arith.constant 0 : index
    %c0_12 = arith.constant 0 : index
    %c0_13 = arith.constant 0 : index
    %8 = vector.load %arg3[%c0_10, %c0_11, %c0_12, %c0_13] : memref<1x8x8x3xf32, #tpu.memory_space<vmem>>, vector<1x8x8x3xf32>
    %9 = vector.shape_cast %8 : vector<1x8x8x3xf32> to vector<8x8x3xf32>
    %c0_14 = arith.constant 0 : index
    %c0_15 = arith.constant 0 : index
    %c0_16 = arith.constant 0 : index
    %c0_17 = arith.constant 0 : index
    %10 = vector.load %arg4[%c0_14, %c0_15, %c0_16, %c0_17] : memref<1x8x8x5xf32, #tpu.memory_space<vmem>>, vector<1x8x8x5xf32>
    %11 = vector.shape_cast %10 : vector<1x8x8x5xf32> to vector<8x8x5xf32>
    %c0_18 = arith.constant 0 : index
    %c0_19 = arith.constant 0 : index
    %c0_20 = arith.constant 0 : index
    %12 = vector.load %arg10[%c0_18, %c0_19, %c0_20] : memref<1x8x128xf32, #tpu.memory_space<vmem>>, vector<1x8x128xf32>
    %13 = vector.shape_cast %12 : vector<1x8x128xf32> to vector<8x128xf32>
    %14 = vector.shape_cast %9 : vector<8x8x3xf32> to vector<64x3xf32>
    %15 = arith.truncf %14 : vector<64x3xf32> to vector<64x3xbf16>
    %16 = arith.extf %3 : vector<3x128xbf16> to vector<3x128xf32>
    %17 = vector.extract_strided_slice %15 {offsets = [0, 0], sizes = [64, 1], strides = [1, 1]} : vector<64x3xbf16> to vector<64x1xbf16>
    %18 = arith.extf %17 : vector<64x1xbf16> to vector<64x1xf32>
    %19 = vector.extract_strided_slice %16 {offsets = [0, 0], sizes = [1, 128], strides = [1, 1]} : vector<3x128xf32> to vector<1x128xf32>
    %20 = vector.broadcast %18 : vector<64x1xf32> to vector<64x128xf32>
    %21 = vector.broadcast %19 : vector<1x128xf32> to vector<64x128xf32>
    %22 = arith.mulf %20, %21 : vector<64x128xf32>
    %23 = vector.extract_strided_slice %15 {offsets = [0, 1], sizes = [64, 1], strides = [1, 1]} : vector<64x3xbf16> to vector<64x1xbf16>
    %24 = arith.extf %23 : vector<64x1xbf16> to vector<64x1xf32>
    %25 = vector.extract_strided_slice %16 {offsets = [1, 0], sizes = [1, 128], strides = [1, 1]} : vector<3x128xf32> to vector<1x128xf32>
    %26 = vector.broadcast %24 : vector<64x1xf32> to vector<64x128xf32>
    %27 = vector.broadcast %25 : vector<1x128xf32> to vector<64x128xf32>
    %28 = arith.mulf %26, %27 : vector<64x128xf32>
    %29 = arith.addf %22, %28 : vector<64x128xf32>
    %30 = vector.extract_strided_slice %15 {offsets = [0, 2], sizes = [64, 1], strides = [1, 1]} : vector<64x3xbf16> to vector<64x1xbf16>
    %31 = arith.extf %30 : vector<64x1xbf16> to vector<64x1xf32>
    %32 = vector.extract_strided_slice %16 {offsets = [2, 0], sizes = [1, 128], strides = [1, 1]} : vector<3x128xf32> to vector<1x128xf32>
    %33 = vector.broadcast %31 : vector<64x1xf32> to vector<64x128xf32>
    %34 = vector.broadcast %32 : vector<1x128xf32> to vector<64x128xf32>
    %35 = arith.mulf %33, %34 : vector<64x128xf32>
    %36 = arith.addf %29, %35 : vector<64x128xf32>
    %37 = vector.shape_cast %11 : vector<8x8x5xf32> to vector<64x5xf32>
    %38 = arith.truncf %37 : vector<64x5xf32> to vector<64x5xbf16>
    %39 = arith.extf %4 : vector<5x128xbf16> to vector<5x128xf32>
    %40 = vector.extract_strided_slice %38 {offsets = [0, 0], sizes = [64, 1], strides = [1, 1]} : vector<64x5xbf16> to vector<64x1xbf16>
    %41 = arith.extf %40 : vector<64x1xbf16> to vector<64x1xf32>
    %42 = vector.extract_strided_slice %39 {offsets = [0, 0], sizes = [1, 128], strides = [1, 1]} : vector<5x128xf32> to vector<1x128xf32>
    %43 = vector.broadcast %41 : vector<64x1xf32> to vector<64x128xf32>
    %44 = vector.broadcast %42 : vector<1x128xf32> to vector<64x128xf32>
    %45 = arith.mulf %43, %44 : vector<64x128xf32>
    %46 = vector.extract_strided_slice %38 {offsets = [0, 1], sizes = [64, 1], strides = [1, 1]} : vector<64x5xbf16> to vector<64x1xbf16>
    %47 = arith.extf %46 : vector<64x1xbf16> to vector<64x1xf32>
    %48 = vector.extract_strided_slice %39 {offsets = [1, 0], sizes = [1, 128], strides = [1, 1]} : vector<5x128xf32> to vector<1x128xf32>
    %49 = vector.broadcast %47 : vector<64x1xf32> to vector<64x128xf32>
    %50 = vector.broadcast %48 : vector<1x128xf32> to vector<64x128xf32>
    %51 = arith.mulf %49, %50 : vector<64x128xf32>
    %52 = arith.addf %45, %51 : vector<64x128xf32>
    %53 = vector.extract_strided_slice %38 {offsets = [0, 2], sizes = [64, 1], strides = [1, 1]} : vector<64x5xbf16> to vector<64x1xbf16>
    %54 = arith.extf %53 : vector<64x1xbf16> to vector<64x1xf32>
    %55 = vector.extract_strided_slice %39 {offsets = [2, 0], sizes = [1, 128], strides = [1, 1]} : vector<5x128xf32> to vector<1x128xf32>
    %56 = vector.broadcast %54 : vector<64x1xf32> to vector<64x128xf32>
    %57 = vector.broadcast %55 : vector<1x128xf32> to vector<64x128xf32>
    %58 = arith.mulf %56, %57 : vector<64x128xf32>
    %59 = arith.addf %52, %58 : vector<64x128xf32>
    %60 = vector.extract_strided_slice %38 {offsets = [0, 3], sizes = [64, 1], strides = [1, 1]} : vector<64x5xbf16> to vector<64x1xbf16>
    %61 = arith.extf %60 : vector<64x1xbf16> to vector<64x1xf32>
    %62 = vector.extract_strided_slice %39 {offsets = [3, 0], sizes = [1, 128], strides = [1, 1]} : vector<5x128xf32> to vector<1x128xf32>
    %63 = vector.broadcast %61 : vector<64x1xf32> to vector<64x128xf32>
    %64 = vector.broadcast %62 : vector<1x128xf32> to vector<64x128xf32>
    %65 = arith.mulf %63, %64 : vector<64x128xf32>
    %66 = arith.addf %59, %65 : vector<64x128xf32>
    %67 = vector.extract_strided_slice %38 {offsets = [0, 4], sizes = [64, 1], strides = [1, 1]} : vector<64x5xbf16> to vector<64x1xbf16>
    %68 = arith.extf %67 : vector<64x1xbf16> to vector<64x1xf32>
    %69 = vector.extract_strided_slice %39 {offsets = [4, 0], sizes = [1, 128], strides = [1, 1]} : vector<5x128xf32> to vector<1x128xf32>
    %70 = vector.broadcast %68 : vector<64x1xf32> to vector<64x128xf32>
    %71 = vector.broadcast %69 : vector<1x128xf32> to vector<64x128xf32>
    %72 = arith.mulf %70, %71 : vector<64x128xf32>
    %73 = arith.addf %66, %72 : vector<64x128xf32>
    %74 = arith.addf %36, %73 : vector<64x128xf32>
    %75 = vector.broadcast %5 : vector<1x128xf32> to vector<64x128xf32>
    %76 = arith.addf %74, %75 : vector<64x128xf32>
    %cst = arith.constant 0.000000e+00 : f32
    %77 = vector.broadcast %cst : f32 to vector<64x128xf32>
    %78 = arith.maximumf %76, %77 : vector<64x128xf32>
    %79 = arith.truncf %78 : vector<64x128xf32> to vector<64x128xbf16>
    %cst_21 = arith.constant dense<0.000000e+00> : vector<64x128xf32>
    %80 = tpu.matmul %79, %6, %cst_21 {dimension_numbers = #tpu.dot_dimension_numbers<[1], [0], [0], [1], [0, 0, 1, 1], [], []>} : vector<64x128xbf16>, vector<128x128xbf16>, vector<64x128xf32> -> vector<64x128xf32>
    %81 = vector.broadcast %7 : vector<1x128xf32> to vector<64x128xf32>
    %82 = arith.addf %80, %81 : vector<64x128xf32>
    %cst_22 = arith.constant 0.000000e+00 : f32
    %83 = vector.broadcast %cst_22 : f32 to vector<64x128xf32>
    %84 = arith.maximumf %82, %83 : vector<64x128xf32>
    %85 = vector.shape_cast %84 : vector<64x128xf32> to vector<8x8x128xf32>
    %cst_23 = arith.constant dense<0xFF800000> : vector<8x128xf32>
    %86 = vector.multi_reduction <maximumf>, %85, %cst_23 [0] : vector<8x8x128xf32> to vector<8x128xf32>
    %87 = arith.maximumf %13, %86 : vector<8x128xf32>
    %c0_24 = arith.constant 0 : index
    %c0_25 = arith.constant 0 : index
    %c0_26 = arith.constant 0 : index
    %88 = vector.load %arg10[%c0_24, %c0_25, %c0_26] : memref<1x8x128xf32, #tpu.memory_space<vmem>>, vector<1x8x128xf32>
    %89 = vector.shape_cast %88 : vector<1x8x128xf32> to vector<8x128xf32>
    %90 = vector.shape_cast %87 : vector<8x128xf32> to vector<1x8x128xf32>
    tpu.vector_store %arg10[%c0_24, %c0_25, %c0_26], %90 {strides = array<i32>} : memref<1x8x128xf32, #tpu.memory_space<vmem>>, vector<1x8x128xf32>,
    return
  }
  func.func @transform_0(%arg0: i32, %arg1: i32, %arg2: i32) -> (i32, i32, i32, i32) {
    %c0_i32 = arith.constant 0 : i32
    %c0_i32_0 = arith.constant 0 : i32
    return %arg0, %arg2, %arg1, %c0_i32 : i32, i32, i32, i32
  }
  func.func @transform_1(%arg0: i32, %arg1: i32, %arg2: i32) -> (i32, i32, i32, i32) {
    %c0_i32 = arith.constant 0 : i32
    %c0_i32_0 = arith.constant 0 : i32
    return %arg0, %arg2, %arg1, %c0_i32 : i32, i32, i32, i32
  }
  func.func @transform_2(%arg0: i32, %arg1: i32, %arg2: i32) -> (i32, i32) {
    %c0_i32 = arith.constant 0 : i32
    %c0_i32_0 = arith.constant 0 : i32
    %c0_i32_1 = arith.constant 0 : i32
    return %c0_i32, %c0_i32_0 : i32, i32
  }
  func.func @transform_3(%arg0: i32, %arg1: i32, %arg2: i32) -> (i32, i32) {
    %c0_i32 = arith.constant 0 : i32
    %c0_i32_0 = arith.constant 0 : i32
    %c0_i32_1 = arith.constant 0 : i32
    return %c0_i32, %c0_i32_0 : i32, i32
  }
  func.func @transform_4(%arg0: i32, %arg1: i32, %arg2: i32) -> (i32, i32) {
    %c0_i32 = arith.constant 0 : i32
    %c0_i32_0 = arith.constant 0 : i32
    %c0_i32_1 = arith.constant 0 : i32
    return %c0_i32, %c0_i32_0 : i32, i32
  }
  func.func @transform_5(%arg0: i32, %arg1: i32, %arg2: i32) -> (i32, i32) {
    %c0_i32 = arith.constant 0 : i32
    %c0_i32_0 = arith.constant 0 : i32
    %c0_i32_1 = arith.constant 0 : i32
    return %c0_i32, %c0_i32_0 : i32, i32
  }
  func.func @transform_6(%arg0: i32, %arg1: i32, %arg2: i32) -> (i32, i32) {
    %c0_i32 = arith.constant 0 : i32
    %c0_i32_0 = arith.constant 0 : i32
    %c0_i32_1 = arith.constant 0 : i32
    return %c0_i32, %c0_i32_0 : i32, i32
  }
  func.func @transform_7(%arg0: i32, %arg1: i32, %arg2: i32) -> (i32, i32, i32) {
    %c0_i32 = arith.constant 0 : i32
    %c0_i32_0 = arith.constant 0 : i32
    return %arg0, %arg1, %c0_i32 : i32, i32, i32
  }
}

</mosaic_0001>

<llo_original>
// kernel: tpu_custom_call.1
$region0: #{tpu_custom_call.1}
  #allocation0 [shape = 'u32[]', space=smem, size = 0x4, offset = 0x4, fixed_abs, tag = 'smem constant byte address 0x4 - core index']
  #allocation1 [shape = 'u32[144,128]{1,0:T(1,128)}', space=vmem, size = 0x12000, scoped, tag = 'internal scratch']
  %s0 = inlined_call_operand.hbm [shape: f32[2,8,8,3], index: 0, kind: input, shape index: {}]
  %s1 = inlined_call_operand.hbm [shape: f32[2,8,8,5], index: 1, kind: input, shape index: {}]
  %s2 = inlined_call_operand.hbm [shape: bf16[3,128], index: 2, kind: input, shape index: {}]
  %s3 = inlined_call_operand.hbm [shape: bf16[5,128], index: 3, kind: input, shape index: {}]
  %s4 = inlined_call_operand.hbm [shape: f32[1,128], index: 4, kind: input, shape index: {}]
  %s5 = inlined_call_operand.hbm [shape: bf16[128,128], index: 5, kind: input, shape index: {}]
  %s6 = inlined_call_operand.hbm [shape: f32[1,128], index: 6, kind: input, shape index: {}]
  %s7 = inlined_call_operand.hbm [shape: f32[2,8,128], index: 7, kind: output, shape index: {}]
  %s8 = sld [smem:[#allocation0]]
  $region93: #{tpu_custom_call.1} parent=0
    _
  %s10 = ssub.s32 1, %s8
  %s11 = scalar_select 0, %s10, %s8
  $region1: #{tpu_custom_call.1} parent=0
    #allocation2 [shape = 'u8[65536]{0}', space=vmem, size = 0x10000, scoped, tag = 'input window, operand 0']
    #allocation3 [shape = 's32[2]{0}', space=sflag, size = 0x8, scoped, tag = 'scoped memory for tpu_custom_call.1']
    #allocation4 [shape = 's32[2]{0}', space=sflag, size = 0x8, scoped, tag = 'scoped memory for tpu_custom_call.1']
    #allocation5 [shape = 'u8[65536]{0}', space=vmem, size = 0x10000, scoped, tag = 'input window, operand 1']
    #allocation6 [shape = 's32[2]{0}', space=sflag, size = 0x8, scoped, tag = 'scoped memory for tpu_custom_call.1']
    #allocation7 [shape = 'u8[1024]{0}', space=vmem, size = 0x400, scoped, tag = 'input window, operand 2, single buffered']
    #allocation8 [shape = 'u8[2048]{0}', space=vmem, size = 0x800, scoped, tag = 'input window, operand 3, single buffered']
    #allocation9 [shape = 's32[1]{0}', space=sflag, size = 0x4, scoped, tag = 'scoped memory for tpu_custom_call.1']
    #allocation10 [shape = 'u8[512]{0}', space=vmem, size = 0x400, scoped, tag = 'input window, operand 4, single buffered']
    #allocation11 [shape = 'u8[32768]{0}', space=vmem, size = 0x8000, scoped, tag = 'input window, operand 5, single buffered']
    #allocation12 [shape = 's32[1]{0}', space=sflag, size = 0x4, scoped, tag = 'scoped memory for tpu_custom_call.1']
    #allocation13 [shape = 'u8[512]{0}', space=vmem, size = 0x400, scoped, tag = 'input window, operand 6, single buffered']
    #allocation14 [shape = 'u8[8192]{0}', space=vmem, size = 0x2000, scoped, tag = 'output window, operand 0']
    %12 = vsyncpa [#allocation3], 0
    %s13 = scalar_lea.sflag [#allocation3], 1
    %14 = vsyncpa %s13, 0
    %15 = vsyncpa [#allocation6], 0
    %s16 = scalar_lea.sflag [#allocation6], 1
    %17 = vsyncpa %s16, 0
    %18 = vsyncpa [#allocation9], 0
    %19 = vsyncpa [#allocation12], 0
    %20 = vsyncpa [#allocation4], 0
    %s21 = scalar_lea.sflag [#allocation4], 1
    %22 = vsyncpa %s21, 0
    loop: start=0, step=1, limit=4
    $region2: #{tpu_custom_call.1} parent=1 // loop_pre_header
      _
    $region3: #{tpu_custom_call.1} parent=1 // loop_header
      %s24 = sphi 0, %s28
      %p25 = scmp.ge.s32.totalorder %s24, 4
      %s31 = sphi 0, %s50
      %s32 = sphi 0, %s46
      %s33 = sphi 0, %s42
      %s34 = sphi 0, %s31
      %s35 = sphi 0, %s32
      %s36 = sphi 0, %s33
      %s37 = sphi 0, %s34
      %s38 = sphi 0, %s35
      %s39 = sphi 0, %s36
      %s57 = sphi 0, %s59
      %s60 = sphi 0, %s57
      %s61 = sphi 0, %s60
      %s77 = sphi 0, %s61
      %s87 = sphi 0, %s89
      %s90 = sphi 0, %s87
      %s91 = sphi 0, %s90
      %s107 = sphi 0, %s91
      %s111 = sphi 0, %s111
      %s113 = sphi 0, %s111
      %s114 = sphi 0, %s113
      %s128 = sphi 0, %s114
      %s132 = sphi 0, %s132
      %s134 = sphi 0, %s132
      %s135 = sphi 0, %s134
      %s149 = sphi 0, %s135
      %s153 = sphi 0, %s153
      %s155 = sphi 0, %s153
      %s156 = sphi 0, %s155
      %s170 = sphi 0, %s156
      %s174 = sphi 0, %s174
      %s176 = sphi 0, %s174
      %s177 = sphi 0, %s176
      %s191 = sphi 0, %s177
      %s195 = sphi 0, %s195
      %s197 = sphi 0, %s195
      %s198 = sphi 0, %s197
      %s212 = sphi 0, %s198
      %s220 = sphi 0, %s222
      %s223 = sphi 0, %s220
      %s224 = sphi 0, %s223
      %s240 = sphi 0, %s224
    $region4: #{tpu_custom_call.1} parent=1 // loop_header_branch
      %27 = sbr.rel (%p25) target = $region8
    $region5: #{tpu_custom_call.1} parent=1 // loop_body
      %s29 = ssub.s32 %s24, 1
      %s30 = ssub.s32 %s24, 2
      %s40 = sadd.s32 1, %s33
      %p41 = scmp.ge.s32.totalorder %s40, 1
      %s42 = scalar_select %p41, 0, %s40
      %s43 = sadd.s32 1, %s32
      %s44 = scalar_select %p41, %s43, %s32
      %p45 = scmp.ge.s32.totalorder %s44, 1
      %s46 = scalar_select %p45, 0, %s44
      %s47 = sadd.s32 1, %s31
      %s48 = scalar_select %p45, %s47, %s31
      %p49 = scmp.ge.s32.totalorder %s48, 2
      %s50 = scalar_select %p49, 0, %s48
      %s51 = ssub.s32 %s31, %s50
      %s52 = ssub.s32 %s33, %s42
      %s53 = sor.u32 %s51, %s52
      %s54 = ssub.s32 %s32, %s46
      %s55 = sor.u32 %s53, %s54
      %p56 = scmp.eq.s32.totalorder %s55, 0
      %s58 = sadd.s32 %s57, 1
      %s59 = scalar_select %p56, %s57, %s58
      %p62 = pneg %p56
      %p63 = scmp.eq.s32.totalorder %s24, 1
      %p64 = por %p62, %p63
      %p65 = scmp.ne.s32.totalorder %s57, %s60
      %p66 = scmp.eq.s32.totalorder %s24, 0
      %p67 = por %p65, %p66
      %p68 = scmp.ne.s32.totalorder %s57, %s60
      %p69 = scmp.eq.s32.totalorder %s29, 1
      %p70 = por %p68, %p69
      %p71 = scmp.ne.s32.totalorder %s60, %s61
      %p72 = scmp.eq.s32.totalorder %s29, 0
      %p73 = por %p71, %p72
      %p74 = scmp.ne.s32.totalorder %s60, %s61
      %p75 = scmp.eq.s32.totalorder %s30, 1
      %p76 = por %p74, %p75
      %p78 = scmp.ne.s32.totalorder %s61, %s77
      %p79 = scmp.eq.s32.totalorder %s30, 0
      %p80 = por %p78, %p79
      %s81 = ssub.s32 %s31, %s50
      %s82 = ssub.s32 %s33, %s42
      %s83 = sor.u32 %s81, %s82
      %s84 = ssub.s32 %s32, %s46
      %s85 = sor.u32 %s83, %s84
      %p86 = scmp.eq.s32.totalorder %s85, 0
      %s88 = sadd.s32 %s87, 1
      %s89 = scalar_select %p86, %s87, %s88
      %p92 = pneg %p86
      %p93 = scmp.eq.s32.totalorder %s24, 1
      %p94 = por %p92, %p93
      %p95 = scmp.ne.s32.totalorder %s87, %s90
      %p96 = scmp.eq.s32.totalorder %s24, 0
      %p97 = por %p95, %p96
      %p98 = scmp.ne.s32.totalorder %s87, %s90
      %p99 = scmp.eq.s32.totalorder %s29, 1
      %p100 = por %p98, %p99
      %p101 = scmp.ne.s32.totalorder %s90, %s91
      %p102 = scmp.eq.s32.totalorder %s29, 0
      %p103 = por %p101, %p102
      %p104 = scmp.ne.s32.totalorder %s90, %s91
      %p105 = scmp.eq.s32.totalorder %s30, 1
      %p106 = por %p104, %p105
      %p108 = scmp.ne.s32.totalorder %s91, %s107
      %p109 = scmp.eq.s32.totalorder %s30, 0
      %p110 = por %p108, %p109
      %s112 = sadd.s32 %s111, 1
      %p115 = scmp.eq.s32.totalorder %s24, 1
      %p116 = scmp.ne.s32.totalorder %s111, %s113
      %p117 = scmp.eq.s32.totalorder %s24, 0
      %p118 = por %p116, %p117
      %p119 = scmp.ne.s32.totalorder %s111, %s113
      %p120 = scmp.eq.s32.totalorder %s29, 1
      %p121 = por %p119, %p120
      %p122 = scmp.ne.s32.totalorder %s113, %s114
      %p123 = scmp.eq.s32.totalorder %s29, 0
      %p124 = por %p122, %p123
      %p125 = scmp.ne.s32.totalorder %s113, %s114
      %p126 = scmp.eq.s32.totalorder %s30, 1
      %p127 = por %p125, %p126
      %p129 = scmp.ne.s32.totalorder %s114, %s128
      %p130 = scmp.eq.s32.totalorder %s30, 0
      %p131 = por %p129, %p130
      %s133 = sadd.s32 %s132, 1
      %p136 = scmp.eq.s32.totalorder %s24, 1
      %p137 = scmp.ne.s32.totalorder %s132, %s134
      %p138 = scmp.eq.s32.totalorder %s24, 0
      %p139 = por %p137, %p138
      %p140 = scmp.ne.s32.totalorder %s132, %s134
      %p141 = scmp.eq.s32.totalorder %s29, 1
      %p142 = por %p140, %p141
      %p143 = scmp.ne.s32.totalorder %s134, %s135
      %p144 = scmp.eq.s32.totalorder %s29, 0
      %p145 = por %p143, %p144
      %p146 = scmp.ne.s32.totalorder %s134, %s135
      %p147 = scmp.eq.s32.totalorder %s30, 1
      %p148 = por %p146, %p147
      %p150 = scmp.ne.s32.totalorder %s135, %s149
      %p151 = scmp.eq.s32.totalorder %s30, 0
      %p152 = por %p150, %p151
      %s154 = sadd.s32 %s153, 1
      %p157 = scmp.eq.s32.totalorder %s24, 1
      %p158 = scmp.ne.s32.totalorder %s153, %s155
      %p159 = scmp.eq.s32.totalorder %s24, 0
      %p160 = por %p158, %p159
      %p161 = scmp.ne.s32.totalorder %s153, %s155
      %p162 = scmp.eq.s32.totalorder %s29, 1
      %p163 = por %p161, %p162
      %p164 = scmp.ne.s32.totalorder %s155, %s156
      %p165 = scmp.eq.s32.totalorder %s29, 0
      %p166 = por %p164, %p165
      %p167 = scmp.ne.s32.totalorder %s155, %s156
      %p168 = scmp.eq.s32.totalorder %s30, 1
      %p169 = por %p167, %p168
      %p171 = scmp.ne.s32.totalorder %s156, %s170
      %p172 = scmp.eq.s32.totalorder %s30, 0
      %p173 = por %p171, %p172
      %s175 = sadd.s32 %s174, 1
      %p178 = scmp.eq.s32.totalorder %s24, 1
      %p179 = scmp.ne.s32.totalorder %s174, %s176
      %p180 = scmp.eq.s32.totalorder %s24, 0
      %p181 = por %p179, %p180
      %p182 = scmp.ne.s32.totalorder %s174, %s176
      %p183 = scmp.eq.s32.totalorder %s29, 1
      %p184 = por %p182, %p183
      %p185 = scmp.ne.s32.totalorder %s176, %s177
      %p186 = scmp.eq.s32.totalorder %s29, 0
      %p187 = por %p185, %p186
      %p188 = scmp.ne.s32.totalorder %s176, %s177
      %p189 = scmp.eq.s32.totalorder %s30, 1
      %p190 = por %p188, %p189
      %p192 = scmp.ne.s32.totalorder %s177, %s191
      %p193 = scmp.eq.s32.totalorder %s30, 0
      %p194 = por %p192, %p193
      %s196 = sadd.s32 %s195, 1
      %p199 = scmp.eq.s32.totalorder %s24, 1
      %p200 = scmp.ne.s32.totalorder %s195, %s197
      %p201 = scmp.eq.s32.totalorder %s24, 0
      %p202 = por %p200, %p201
      %p203 = scmp.ne.s32.totalorder %s195, %s197
      %p204 = scmp.eq.s32.totalorder %s29, 1
      %p205 = por %p203, %p204
      %p206 = scmp.ne.s32.totalorder %s197, %s198
      %p207 = scmp.eq.s32.totalorder %s29, 0
      %p208 = por %p206, %p207
      %p209 = scmp.ne.s32.totalorder %s197, %s198
      %p210 = scmp.eq.s32.totalorder %s30, 1
      %p211 = por %p209, %p210
      %p213 = scmp.ne.s32.totalorder %s198, %s212
      %p214 = scmp.eq.s32.totalorder %s30, 0
      %p215 = por %p213, %p214
      %s216 = ssub.s32 %s31, %s50
      %s217 = ssub.s32 %s32, %s46
      %s218 = sor.u32 %s216, %s217
      %p219 = scmp.eq.s32.totalorder %s218, 0
      %s221 = sadd.s32 %s220, 1
      %s222 = scalar_select %p219, %s220, %s221
      %p225 = pneg %p219
      %p226 = scmp.eq.s32.totalorder %s24, 1
      %p227 = por %p225, %p226
      %p228 = scmp.ne.s32.totalorder %s220, %s223
      %p229 = scmp.eq.s32.totalorder %s24, 0
      %p230 = por %p228, %p229
      %p231 = scmp.ne.s32.totalorder %s220, %s223
      %p232 = scmp.eq.s32.totalorder %s29, 1
      %p233 = por %p231, %p232
      %p234 = scmp.ne.s32.totalorder %s223, %s224
      %p235 = scmp.eq.s32.totalorder %s29, 0
      %p236 = por %p234, %p235
      %p237 = scmp.ne.s32.totalorder %s223, %s224
      %p238 = scmp.eq.s32.totalorder %s30, 1
      %p239 = por %p237, %p238
      %p241 = scmp.ne.s32.totalorder %s224, %s240
      %p242 = scmp.eq.s32.totalorder %s30, 0
      %p243 = por %p241, %p242
      %p244 = scmp.le.s32.totalorder 1, %s24
      %p245 = scmp.lt.s32.totalorder %s24, 3
      %p246 = pnand %p244, %p245
      %p247 = pneg %p246
      // Predicated region
      $region9: #{tpu_custom_call.1} parent=5 // pred_check
        _
      $region10: #{tpu_custom_call.1} parent=5 // pred_check_branch
        %249 = sbr.rel (%p246) target = $region12
      $region11: #{tpu_custom_call.1} parent=5 // pred_region
        %s250 = ssub.s32 %s24, 1
        // Predicated region
        $region13: #{tpu_custom_call.1} parent=11 // pred_check
          %p251 = pneg %p124
        $region14: #{tpu_custom_call.1} parent=11 // pred_check_branch
          %253 = sbr.rel (%p251) target = $region16
        $region15: #{tpu_custom_call.1} parent=11 // pred_region
          %s255 = ssub.s32 32, 32
          %256 = vsyncadd [#allocation6], %s255
          %s258 = sshll.u32 [#allocation7], 4
          %s259 = int_to_ptr.vmem [resolvable:$true] %s258
          %261 = dma.hbm_to_vmem [thread:$0]  %s2, 32, %s259, [#allocation6]
        $region16: #{tpu_custom_call.1} parent=11 // pred_fallthru
          _
        // Predicated region
        $region17: #{tpu_custom_call.1} parent=11 // pred_check
          %p262 = pneg %p145
        $region18: #{tpu_custom_call.1} parent=11 // pred_check_branch
          %264 = sbr.rel (%p262) target = $region20
        $region19: #{tpu_custom_call.1} parent=11 // pred_region
          %s266 = ssub.s32 64, 64
          %267 = vsyncadd [#allocation9], %s266
          %s269 = sshll.u32 [#allocation8], 4
          %s270 = int_to_ptr.vmem [resolvable:$true] %s269
          %272 = dma.hbm_to_vmem [thread:$0]  %s3, 64, %s270, [#allocation9]
        $region20: #{tpu_custom_call.1} parent=11 // pred_fallthru
          _
        // Predicated region
        $region21: #{tpu_custom_call.1} parent=11 // pred_check
          %p273 = pneg %p166
        $region22: #{tpu_custom_call.1} parent=11 // pred_check_branch
          %275 = sbr.rel (%p273) target = $region24
        $region23: #{tpu_custom_call.1} parent=11 // pred_region
          %s277 = ssub.s32 16, 16
          %278 = vsyncadd [#allocation9], %s277
          %s280 = sshll.u32 [#allocation10], 4
          %s281 = int_to_ptr.vmem [resolvable:$true] %s280
          %283 = dma.hbm_to_vmem [thread:$0]  %s4, 16, %s281, [#allocation9]
        $region24: #{tpu_custom_call.1} parent=11 // pred_fallthru
          _
        // Predicated region
        $region25: #{tpu_custom_call.1} parent=11 // pred_check
          %p284 = pneg %p187
        $region26: #{tpu_custom_call.1} parent=11 // pred_check_branch
          %286 = sbr.rel (%p284) target = $region28
        $region27: #{tpu_custom_call.1} parent=11 // pred_region
          %s288 = ssub.s32 1024, 1024
          %289 = vsyncadd [#allocation12], %s288
          %s290 = sshll.u32 [#allocation11], 4
          %s291 = int_to_ptr.vmem [resolvable:$true] %s290
          %296 = dma.hbm_to_vmem [thread:$0]  %s5, 1024, %s291, [#allocation12], 64, 64, 4
        $region28: #{tpu_custom_call.1} parent=11 // pred_fallthru
          _
        // Predicated region
        $region29: #{tpu_custom_call.1} parent=11 // pred_check
          %p297 = pneg %p208
        $region30: #{tpu_custom_call.1} parent=11 // pred_check_branch
          %299 = sbr.rel (%p297) target = $region32
        $region31: #{tpu_custom_call.1} parent=11 // pred_region
          %s301 = ssub.s32 16, 16
          %302 = vsyncadd [#allocation12], %s301
          %s304 = sshll.u32 [#allocation13], 4
          %s305 = int_to_ptr.vmem [resolvable:$true] %s304
          %307 = dma.hbm_to_vmem [thread:$0]  %s6, 16, %s305, [#allocation12]
        $region32: #{tpu_custom_call.1} parent=11 // pred_fallthru
          _
      $region12: #{tpu_custom_call.1} parent=5 // pred_fallthru
        _
      %p308 = scmp.lt.s32.totalorder %s24, 2
      // Predicated region
      $region33: #{tpu_custom_call.1} parent=5 // pred_check
        %p309 = pneg %p308
      $region34: #{tpu_custom_call.1} parent=5 // pred_check_branch
        %311 = sbr.rel (%p309) target = $region36
      $region35: #{tpu_custom_call.1} parent=5 // pred_region
        // Predicated region
        $region37: #{tpu_custom_call.1} parent=35 // pred_check
          %p312 = pneg %p67
        $region38: #{tpu_custom_call.1} parent=35 // pred_check_branch
          %314 = sbr.rel (%p312) target = $region40
        $region39: #{tpu_custom_call.1} parent=35 // pred_region
          %s315 = sand.u32 %s57, 1
          %s316 = scalar_lea.sflag [#allocation3], %s315
          %s317 = sand.u32 %s57, 1
          %s318 = smul.addr %s317, 64
          %s319 = scalar_lea.vmem [#allocation2], %s318
          %s320 = smul.u32 8, %s33
          %s322 = ssub.s32 1024, 1024
          %323 = vsyncadd %s316, %s322
          %s324 = sadd.s32 %s32, %s320
          %s325 = smul.addr %s31, 8
          %s326 = sadd.s32 %s324, %s325
          %s327 = smul.addr %s326, 128
          %s328 = scalar_lea.hbm %s0, %s327
          %s329 = sshll.u32 %s319, 4
          %s330 = int_to_ptr.vmem [resolvable:$true] %s329
          %335 = dma.hbm_to_vmem [thread:$0]  %s328, 1024, %s330, %s316, 128, 128, 8
        $region40: #{tpu_custom_call.1} parent=35 // pred_fallthru
          _
        // Predicated region
        $region41: #{tpu_custom_call.1} parent=35 // pred_check
          %p336 = pneg %p97
        $region42: #{tpu_custom_call.1} parent=35 // pred_check_branch
          %338 = sbr.rel (%p336) target = $region44
        $region43: #{tpu_custom_call.1} parent=35 // pred_region
          %s339 = sand.u32 %s24, 1
          %s340 = scalar_lea.sflag [#allocation6], %s339
          %s341 = sand.u32 %s87, 1
          %s342 = smul.addr %s341, 64
          %s343 = scalar_lea.vmem [#allocation5], %s342
          %s344 = smul.u32 8, %s33
          %s346 = ssub.s32 1024, 1024
          %347 = vsyncadd %s340, %s346
          %s348 = sadd.s32 %s32, %s344
          %s349 = smul.addr %s31, 8
          %s350 = sadd.s32 %s348, %s349
          %s351 = smul.addr %s350, 128
          %s352 = scalar_lea.hbm %s1, %s351
          %s353 = sshll.u32 %s343, 4
          %s354 = int_to_ptr.vmem [resolvable:$true] %s353
          %359 = dma.hbm_to_vmem [thread:$0]  %s352, 1024, %s354, %s340, 128, 128, 8
        $region44: #{tpu_custom_call.1} parent=35 // pred_fallthru
          _
      $region36: #{tpu_custom_call.1} parent=5 // pred_fallthru
        _
      %p360 = scmp.le.s32.totalorder 1, %s24
      %p361 = scmp.lt.s32.totalorder %s24, 3
      %p362 = pnand %p360, %p361
      %p363 = pneg %p362
      // Predicated region
      $region45: #{tpu_custom_call.1} parent=5 // pred_check
        _
      $region46: #{tpu_custom_call.1} parent=5 // pred_check_branch
        %365 = sbr.rel (%p362) target = $region48
      $region47: #{tpu_custom_call.1} parent=5 // pred_region
        %s366 = ssub.s32 %s24, 1
        %s367 = sand.u32 %s60, 1
        %s368 = scalar_lea.sflag [#allocation3], %s367
        %s369 = sand.u32 %s60, 1
        %s370 = smul.addr %s369, 64
        %s371 = scalar_lea.vmem [#allocation2], %s370
        // Predicated region
        $region49: #{tpu_custom_call.1} parent=47 // pred_check
          %p372 = pneg %p73
        $region50: #{tpu_custom_call.1} parent=47 // pred_check_branch
          %374 = sbr.rel (%p372) target = $region52
        $region51: #{tpu_custom_call.1} parent=47 // pred_region
          %375 = dma.done %s368, 1024
        $region52: #{tpu_custom_call.1} parent=47 // pred_fallthru
          _
        %s376 = sand.u32 %s29, 1
        %s377 = scalar_lea.sflag [#allocation6], %s376
        %s378 = sand.u32 %s90, 1
        %s379 = smul.addr %s378, 64
        %s380 = scalar_lea.vmem [#allocation5], %s379
        // Predicated region
        $region53: #{tpu_custom_call.1} parent=47 // pred_check
          %p381 = pneg %p103
        $region54: #{tpu_custom_call.1} parent=47 // pred_check_branch
          %383 = sbr.rel (%p381) target = $region56
        $region55: #{tpu_custom_call.1} parent=47 // pred_region
          %384 = dma.done %s377, 1024
        $region56: #{tpu_custom_call.1} parent=47 // pred_fallthru
          _
        // Predicated region
        $region57: #{tpu_custom_call.1} parent=47 // pred_check
          %p385 = pneg %p124
        $region58: #{tpu_custom_call.1} parent=47 // pred_check_branch
          %387 = sbr.rel (%p385) target = $region60
        $region59: #{tpu_custom_call.1} parent=47 // pred_region
          %388 = dma.done [#allocation6], 32
        $region60: #{tpu_custom_call.1} parent=47 // pred_fallthru
          _
        // Predicated region
        $region61: #{tpu_custom_call.1} parent=47 // pred_check
          %p389 = pneg %p145
        $region62: #{tpu_custom_call.1} parent=47 // pred_check_branch
          %391 = sbr.rel (%p389) target = $region64
        $region63: #{tpu_custom_call.1} parent=47 // pred_region
          %392 = dma.done [#allocation9], 64
        $region64: #{tpu_custom_call.1} parent=47 // pred_fallthru
          _
        // Predicated region
        $region65: #{tpu_custom_call.1} parent=47 // pred_check
          %p393 = pneg %p166
        $region66: #{tpu_custom_call.1} parent=47 // pred_check_branch
          %395 = sbr.rel (%p393) target = $region68
        $region67: #{tpu_custom_call.1} parent=47 // pred_region
          %396 = dma.done [#allocation9], 16
        $region68: #{tpu_custom_call.1} parent=47 // pred_fallthru
          _
        // Predicated region
        $region69: #{tpu_custom_call.1} parent=47 // pred_check
          %p397 = pneg %p187
        $region70: #{tpu_custom_call.1} parent=47 // pred_check_branch
          %399 = sbr.rel (%p397) target = $region72
        $region71: #{tpu_custom_call.1} parent=47 // pred_region
          %400 = dma.done [#allocation12], 1024
        $region72: #{tpu_custom_call.1} parent=47 // pred_fallthru
          _
        // Predicated region
        $region73: #{tpu_custom_call.1} parent=47 // pred_check
          %p401 = pneg %p208
        $region74: #{tpu_custom_call.1} parent=47 // pred_check_branch
          %403 = sbr.rel (%p401) target = $region76
        $region75: #{tpu_custom_call.1} parent=47 // pred_region
          %404 = dma.done [#allocation12], 16
        $region76: #{tpu_custom_call.1} parent=47 // pred_fallthru
          _
        %s405 = sand.u32 %s60, 1
        %s406 = scalar_lea.sflag [#allocation3], %s405
        %s407 = sand.u32 %s60, 1
        %s408 = smul.addr %s407, 64
        %s409 = scalar_lea.vmem [#allocation2], %s408
        %p410 = pneg %p73
        %p411 = pneg %p70
        %s412 = sand.u32 %s29, 1
        %s413 = scalar_lea.sflag [#allocation6], %s412
        %s414 = sand.u32 %s90, 1
        %s415 = smul.addr %s414, 64
        %s416 = scalar_lea.vmem [#allocation5], %s415
        %p417 = pneg %p103
        %p418 = pneg %p100
        %p419 = pneg %p124
        %p420 = pneg %p121
        %p421 = pneg %p145
        %p422 = pneg %p142
        %p423 = pneg %p166
        %p424 = pneg %p163
        %p425 = pneg %p187
        %p426 = pneg %p184
        %p427 = pneg %p208
        %p428 = pneg %p205
        %p429 = pneg %p236
        %p430 = pneg %p233
        %s431 = sand.u32 %s223, 1
        %s432 = scalar_lea.sflag [#allocation4], %s431
        %s433 = sand.u32 %s223, 1
        %s434 = smul.addr %s433, 8
        %s435 = scalar_lea.vmem [#allocation14], %s434
        %s436 = smul.u32 8, %s36
        %s437 = smul.u32 8, %s36
        %p439 = scmp.eq.s32.totalorder %s36, 0
        // Predicated region
        $region77: #{tpu_custom_call.1} parent=47 // pred_check
          %p440 = pneg %p439
        $region78: #{tpu_custom_call.1} parent=47 // pred_check_branch
          %442 = sbr.rel (%p440) target = $region80
        $region79: #{tpu_custom_call.1} parent=47 // pred_region
          %443 = vst [vmem:[%s435] sm:$0xff] 0.0
        $region80: #{tpu_custom_call.1} parent=47 // pred_fallthru
          _
        %v444 = vld [vmem:[#allocation7] sm:$0x3]
        %v445 = vld [vmem:[#allocation8] sm:$0x7]
        %v446 = vld [vmem:[#allocation10] sm:$0x1]
        %v447 = vld [vmem:[#allocation11] sm:$0xf]
        %v448 = vld [vmem:[#allocation11 + $0x4] sm:$0xf]
        %v449 = vld [vmem:[#allocation11 + $0x8] sm:$0xf]
        %v450 = vld [vmem:[#allocation11 + $0xc] sm:$0xf]
        %v451 = vld [vmem:[#allocation11 + $0x10] sm:$0xf]
        %v452 = vld [vmem:[#allocation11 + $0x14] sm:$0xf]
        %v453 = vld [vmem:[#allocation11 + $0x18] sm:$0xf]
        %v454 = vld [vmem:[#allocation11 + $0x1c] sm:$0xf]
        %v455 = vld [vmem:[#allocation11 + $0x20] sm:$0xf]
        %v456 = vld [vmem:[#allocation11 + $0x24] sm:$0xf]
        %v457 = vld [vmem:[#allocation11 + $0x28] sm:$0xf]
        %v458 = vld [vmem:[#allocation11 + $0x2c] sm:$0xf]
        %v459 = vld [vmem:[#allocation11 + $0x30] sm:$0xf]
        %v460 = vld [vmem:[#allocation11 + $0x34] sm:$0xf]
        %v461 = vld [vmem:[#allocation11 + $0x38] sm:$0xf]
        %v462 = vld [vmem:[#allocation11 + $0x3c] sm:$0xf]
        %v463 = vld [vmem:[#allocation13] sm:$0x1]
        %v464 = vld [vmem:[%s371] sm:$0xff]
        %v465 = vld [vmem:[%s371 + $0x8] sm:$0xff]
        %v466 = vld [vmem:[%s371 + $0x10] sm:$0xff]
        %v467 = vld [vmem:[%s371 + $0x18] sm:$0xff]
        %v468 = vld [vmem:[%s371 + $0x20] sm:$0xff]
        %v469 = vld [vmem:[%s371 + $0x28] sm:$0xff]
        %v470 = vld [vmem:[%s371 + $0x30] sm:$0xff]
        %v471 = vld [vmem:[%s371 + $0x38] sm:$0xff]
        %v472 = vld [vmem:[%s380] sm:$0xff]
        %v473 = vld [vmem:[%s380 + $0x8] sm:$0xff]
        %v474 = vld [vmem:[%s380 + $0x10] sm:$0xff]
        %v475 = vld [vmem:[%s380 + $0x18] sm:$0xff]
        %v476 = vld [vmem:[%s380 + $0x20] sm:$0xff]
        %v477 = vld [vmem:[%s380 + $0x28] sm:$0xff]
        %v478 = vld [vmem:[%s380 + $0x30] sm:$0xff]
        %v479 = vld [vmem:[%s380 + $0x38] sm:$0xff]
        %v480 = vld [vmem:[%s435] sm:$0xff]
        %v481 = vpack.c.bf16 %v465, %v464
        %v482 = vpack.c.bf16 %v467, %v466
        %v483 = vpack.c.bf16 %v469, %v468
        %v484 = vpack.c.bf16 %v471, %v470
        %v485 = vunpack.c.l.bf16 %v444
        %v486 = vunpack.c.l.bf16 %v481
        %v487 = vunpack.c.h.bf16 %v481
        %v488 = vunpack.c.l.bf16 %v482
        %v489 = vunpack.c.h.bf16 %v482
        %v490 = vunpack.c.l.bf16 %v483
        %v491 = vunpack.c.h.bf16 %v483
        %v492 = vunpack.c.l.bf16 %v484
        %v493 = vunpack.c.h.bf16 %v484
        %495 = vset.pattern.permute.xlu0 0
        %496 = vperm.xlu0 %495, %v486
        %v497 = vpop.permute.xlu0 %496
        %500 = vset.pattern.permute.xlu0 0
        %501 = vperm.xlu0 %500, %v487
        %v502 = vpop.permute.xlu0 %501
        %505 = vset.pattern.permute.xlu0 0
        %506 = vperm.xlu0 %505, %v488
        %v507 = vpop.permute.xlu0 %506
        %510 = vset.pattern.permute.xlu0 0
        %511 = vperm.xlu0 %510, %v489
        %v512 = vpop.permute.xlu0 %511
        %515 = vset.pattern.permute.xlu0 0
        %516 = vperm.xlu0 %515, %v490
        %v517 = vpop.permute.xlu0 %516
        %520 = vset.pattern.permute.xlu0 0
        %521 = vperm.xlu0 %520, %v491
        %v522 = vpop.permute.xlu0 %521
        %525 = vset.pattern.permute.xlu0 0
        %526 = vperm.xlu0 %525, %v492
        %v527 = vpop.permute.xlu0 %526
        %530 = vset.pattern.permute.xlu0 0
        %531 = vperm.xlu0 %530, %v493
        %v532 = vpop.permute.xlu0 %531
        %v534 = vlaneseq
        %v535 = vshrl.u32 %v534, 7
        %v536 = vsub.s32 0, %v535
        %v537 = vrot.slane %v485, %v536
        %v538 = vmul.f32 %v497, %v537
        %v539 = vmul.f32 %v502, %v537
        %v540 = vmul.f32 %v507, %v537
        %v541 = vmul.f32 %v512, %v537
        %v542 = vmul.f32 %v517, %v537
        %v543 = vmul.f32 %v522, %v537
        %v544 = vmul.f32 %v527, %v537
        %v545 = vmul.f32 %v532, %v537
        %546 = vset.pattern.permute.xlu0 1
        %547 = vperm.xlu0 %546, %v486
        %v548 = vpop.permute.xlu0 %547
        %550 = vset.pattern.permute.xlu0 1
        %551 = vperm.xlu0 %550, %v487
        %v552 = vpop.permute.xlu0 %551
        %554 = vset.pattern.permute.xlu0 1
        %555 = vperm.xlu0 %554, %v488
        %v556 = vpop.permute.xlu0 %555
        %558 = vset.pattern.permute.xlu0 1
        %559 = vperm.xlu0 %558, %v489
        %v560 = vpop.permute.xlu0 %559
        %562 = vset.pattern.permute.xlu0 1
        %563 = vperm.xlu0 %562, %v490
        %v564 = vpop.permute.xlu0 %563
        %566 = vset.pattern.permute.xlu0 1
        %567 = vperm.xlu0 %566, %v491
        %v568 = vpop.permute.xlu0 %567
        %570 = vset.pattern.permute.xlu0 1
        %571 = vperm.xlu0 %570, %v492
        %v572 = vpop.permute.xlu0 %571
        %574 = vset.pattern.permute.xlu0 1
        %575 = vperm.xlu0 %574, %v493
        %v576 = vpop.permute.xlu0 %575
        %v578 = vlaneseq
        %v579 = vshrl.u32 %v578, 7
        %v580 = vsub.s32 1, %v579
        %v581 = vrot.slane %v485, %v580
        %v582 = vmul.f32 %v548, %v581
        %v583 = vmul.f32 %v552, %v581
        %v584 = vmul.f32 %v556, %v581
        %v585 = vmul.f32 %v560, %v581
        %v586 = vmul.f32 %v564, %v581
        %v587 = vmul.f32 %v568, %v581
        %v588 = vmul.f32 %v572, %v581
        %v589 = vmul.f32 %v576, %v581
        %v590 = vadd.f32 %v538, %v582
        %v591 = vadd.f32 %v539, %v583
        %v592 = vadd.f32 %v540, %v584
        %v593 = vadd.f32 %v541, %v585
        %v594 = vadd.f32 %v542, %v586
        %v595 = vadd.f32 %v543, %v587
        %v596 = vadd.f32 %v544, %v588
        %v597 = vadd.f32 %v545, %v589
        %598 = vset.pattern.permute.xlu0 2
        %599 = vperm.xlu0 %598, %v486
        %v600 = vpop.permute.xlu0 %599
        %602 = vset.pattern.permute.xlu0 2
        %603 = vperm.xlu0 %602, %v487
        %v604 = vpop.permute.xlu0 %603
        %606 = vset.pattern.permute.xlu0 2
        %607 = vperm.xlu0 %606, %v488
        %v608 = vpop.permute.xlu0 %607
        %610 = vset.pattern.permute.xlu0 2
        %611 = vperm.xlu0 %610, %v489
        %v612 = vpop.permute.xlu0 %611
        %614 = vset.pattern.permute.xlu0 2
        %615 = vperm.xlu0 %614, %v490
        %v616 = vpop.permute.xlu0 %615
        %618 = vset.pattern.permute.xlu0 2
        %619 = vperm.xlu0 %618, %v491
        %v620 = vpop.permute.xlu0 %619
        %622 = vset.pattern.permute.xlu0 2
        %623 = vperm.xlu0 %622, %v492
        %v624 = vpop.permute.xlu0 %623
        %626 = vset.pattern.permute.xlu0 2
        %627 = vperm.xlu0 %626, %v493
        %v628 = vpop.permute.xlu0 %627
        %v630 = vlaneseq
        %v631 = vshrl.u32 %v630, 7
        %v632 = vsub.s32 2, %v631
        %v633 = vrot.slane %v485, %v632
        %v634 = vmul.f32 %v600, %v633
        %v635 = vmul.f32 %v604, %v633
        %v636 = vmul.f32 %v608, %v633
        %v637 = vmul.f32 %v612, %v633
        %v638 = vmul.f32 %v616, %v633
        %v639 = vmul.f32 %v620, %v633
        %v640 = vmul.f32 %v624, %v633
        %v641 = vmul.f32 %v628, %v633
        %v642 = vadd.f32 %v590, %v634
        %v643 = vadd.f32 %v591, %v635
        %v644 = vadd.f32 %v592, %v636
        %v645 = vadd.f32 %v593, %v637
        %v646 = vadd.f32 %v594, %v638
        %v647 = vadd.f32 %v595, %v639
        %v648 = vadd.f32 %v596, %v640
        %v649 = vadd.f32 %v597, %v641
        %v650 = vpack.c.bf16 %v473, %v472
        %v651 = vpack.c.bf16 %v475, %v474
        %v652 = vpack.c.bf16 %v477, %v476
        %v653 = vpack.c.bf16 %v479, %v478
        %v654 = vunpack.c.l.bf16 %v445
        %v655 = vunpack.c.l.bf16 %v650
        %v656 = vunpack.c.h.bf16 %v650
        %v657 = vunpack.c.l.bf16 %v651
        %v658 = vunpack.c.h.bf16 %v651
        %v659 = vunpack.c.l.bf16 %v652
        %v660 = vunpack.c.h.bf16 %v652
        %v661 = vunpack.c.l.bf16 %v653
        %v662 = vunpack.c.h.bf16 %v653
        %664 = vset.pattern.permute.xlu0 0
        %665 = vperm.xlu0 %664, %v655
        %v666 = vpop.permute.xlu0 %665
        %669 = vset.pattern.permute.xlu0 0
        %670 = vperm.xlu0 %669, %v656
        %v671 = vpop.permute.xlu0 %670
        %674 = vset.pattern.permute.xlu0 0
        %675 = vperm.xlu0 %674, %v657
        %v676 = vpop.permute.xlu0 %675
        %679 = vset.pattern.permute.xlu0 0
        %680 = vperm.xlu0 %679, %v658
        %v681 = vpop.permute.xlu0 %680
        %684 = vset.pattern.permute.xlu0 0
        %685 = vperm.xlu0 %684, %v659
        %v686 = vpop.permute.xlu0 %685
        %689 = vset.pattern.permute.xlu0 0
        %690 = vperm.xlu0 %689, %v660
        %v691 = vpop.permute.xlu0 %690
        %694 = vset.pattern.permute.xlu0 0
        %695 = vperm.xlu0 %694, %v661
        %v696 = vpop.permute.xlu0 %695
        %699 = vset.pattern.permute.xlu0 0
        %700 = vperm.xlu0 %699, %v662
        %v701 = vpop.permute.xlu0 %700
        %v703 = vlaneseq
        %v704 = vshrl.u32 %v703, 7
        %v705 = vsub.s32 0, %v704
        %v706 = vrot.slane %v654, %v705
        %v707 = vmul.f32 %v666, %v706
        %v708 = vmul.f32 %v671, %v706
        %v709 = vmul.f32 %v676, %v706
        %v710 = vmul.f32 %v681, %v706
        %v711 = vmul.f32 %v686, %v706
        %v712 = vmul.f32 %v691, %v706
        %v713 = vmul.f32 %v696, %v706
        %v714 = vmul.f32 %v701, %v706
        %715 = vset.pattern.permute.xlu0 1
        %716 = vperm.xlu0 %715, %v655
        %v717 = vpop.permute.xlu0 %716
        %719 = vset.pattern.permute.xlu0 1
        %720 = vperm.xlu0 %719, %v656
        %v721 = vpop.permute.xlu0 %720
        %723 = vset.pattern.permute.xlu0 1
        %724 = vperm.xlu0 %723, %v657
        %v725 = vpop.permute.xlu0 %724
        %727 = vset.pattern.permute.xlu0 1
        %728 = vperm.xlu0 %727, %v658
        %v729 = vpop.permute.xlu0 %728
        %731 = vset.pattern.permute.xlu0 1
        %732 = vperm.xlu0 %731, %v659
        %v733 = vpop.permute.xlu0 %732
        %735 = vset.pattern.permute.xlu0 1
        %736 = vperm.xlu0 %735, %v660
        %v737 = vpop.permute.xlu0 %736
        %739 = vset.pattern.permute.xlu0 1
        %740 = vperm.xlu0 %739, %v661
        %v741 = vpop.permute.xlu0 %740
        %743 = vset.pattern.permute.xlu0 1
        %744 = vperm.xlu0 %743, %v662
        %v745 = vpop.permute.xlu0 %744
        %v747 = vlaneseq
        %v748 = vshrl.u32 %v747, 7
        %v749 = vsub.s32 1, %v748
        %v750 = vrot.slane %v654, %v749
        %v751 = vmul.f32 %v717, %v750
        %v752 = vmul.f32 %v721, %v750
        %v753 = vmul.f32 %v725, %v750
        %v754 = vmul.f32 %v729, %v750
        %v755 = vmul.f32 %v733, %v750
        %v756 = vmul.f32 %v737, %v750
        %v757 = vmul.f32 %v741, %v750
        %v758 = vmul.f32 %v745, %v750
        %v759 = vadd.f32 %v707, %v751
        %v760 = vadd.f32 %v708, %v752
        %v761 = vadd.f32 %v709, %v753
        %v762 = vadd.f32 %v710, %v754
        %v763 = vadd.f32 %v711, %v755
        %v764 = vadd.f32 %v712, %v756
        %v765 = vadd.f32 %v713, %v757
        %v766 = vadd.f32 %v714, %v758
        %767 = vset.pattern.permute.xlu0 2
        %768 = vperm.xlu0 %767, %v655
        %v769 = vpop.permute.xlu0 %768
        %771 = vset.pattern.permute.xlu0 2
        %772 = vperm.xlu0 %771, %v656
        %v773 = vpop.permute.xlu0 %772
        %775 = vset.pattern.permute.xlu0 2
        %776 = vperm.xlu0 %775, %v657
        %v777 = vpop.permute.xlu0 %776
        %779 = vset.pattern.permute.xlu0 2
        %780 = vperm.xlu0 %779, %v658
        %v781 = vpop.permute.xlu0 %780
        %783 = vset.pattern.permute.xlu0 2
        %784 = vperm.xlu0 %783, %v659
        %v785 = vpop.permute.xlu0 %784
        %787 = vset.pattern.permute.xlu0 2
        %788 = vperm.xlu0 %787, %v660
        %v789 = vpop.permute.xlu0 %788
        %791 = vset.pattern.permute.xlu0 2
        %792 = vperm.xlu0 %791, %v661
        %v793 = vpop.permute.xlu0 %792
        %795 = vset.pattern.permute.xlu0 2
        %796 = vperm.xlu0 %795, %v662
        %v797 = vpop.permute.xlu0 %796
        %v799 = vlaneseq
        %v800 = vshrl.u32 %v799, 7
        %v801 = vsub.s32 2, %v800
        %v802 = vrot.slane %v654, %v801
        %v803 = vmul.f32 %v769, %v802
        %v804 = vmul.f32 %v773, %v802
        %v805 = vmul.f32 %v777, %v802
        %v806 = vmul.f32 %v781, %v802
        %v807 = vmul.f32 %v785, %v802
        %v808 = vmul.f32 %v789, %v802
        %v809 = vmul.f32 %v793, %v802
        %v810 = vmul.f32 %v797, %v802
        %v811 = vadd.f32 %v759, %v803
        %v812 = vadd.f32 %v760, %v804
        %v813 = vadd.f32 %v761, %v805
        %v814 = vadd.f32 %v762, %v806
        %v815 = vadd.f32 %v763, %v807
        %v816 = vadd.f32 %v764, %v808
        %v817 = vadd.f32 %v765, %v809
        %v818 = vadd.f32 %v766, %v810
        %819 = vset.pattern.permute.xlu0 3
        %820 = vperm.xlu0 %819, %v655
        %v821 = vpop.permute.xlu0 %820
        %823 = vset.pattern.permute.xlu0 3
        %824 = vperm.xlu0 %823, %v656
        %v825 = vpop.permute.xlu0 %824
        %827 = vset.pattern.permute.xlu0 3
        %828 = vperm.xlu0 %827, %v657
        %v829 = vpop.permute.xlu0 %828
        %831 = vset.pattern.permute.xlu0 3
        %832 = vperm.xlu0 %831, %v658
        %v833 = vpop.permute.xlu0 %832
        %835 = vset.pattern.permute.xlu0 3
        %836 = vperm.xlu0 %835, %v659
        %v837 = vpop.permute.xlu0 %836
        %839 = vset.pattern.permute.xlu0 3
        %840 = vperm.xlu0 %839, %v660
        %v841 = vpop.permute.xlu0 %840
        %843 = vset.pattern.permute.xlu0 3
        %844 = vperm.xlu0 %843, %v661
        %v845 = vpop.permute.xlu0 %844
        %847 = vset.pattern.permute.xlu0 3
        %848 = vperm.xlu0 %847, %v662
        %v849 = vpop.permute.xlu0 %848
        %v851 = vlaneseq
        %v852 = vshrl.u32 %v851, 7
        %v853 = vsub.s32 3, %v852
        %v854 = vrot.slane %v654, %v853
        %v855 = vmul.f32 %v821, %v854
        %v856 = vmul.f32 %v825, %v854
        %v857 = vmul.f32 %v829, %v854
        %v858 = vmul.f32 %v833, %v854
        %v859 = vmul.f32 %v837, %v854
        %v860 = vmul.f32 %v841, %v854
        %v861 = vmul.f32 %v845, %v854
        %v862 = vmul.f32 %v849, %v854
        %v863 = vadd.f32 %v811, %v855
        %v864 = vadd.f32 %v812, %v856
        %v865 = vadd.f32 %v813, %v857
        %v866 = vadd.f32 %v814, %v858
        %v867 = vadd.f32 %v815, %v859
        %v868 = vadd.f32 %v816, %v860
        %v869 = vadd.f32 %v817, %v861
        %v870 = vadd.f32 %v818, %v862
        %871 = vset.pattern.permute.xlu0 4
        %872 = vperm.xlu0 %871, %v655
        %v873 = vpop.permute.xlu0 %872
        %875 = vset.pattern.permute.xlu0 4
        %876 = vperm.xlu0 %875, %v656
        %v877 = vpop.permute.xlu0 %876
        %879 = vset.pattern.permute.xlu0 4
        %880 = vperm.xlu0 %879, %v657
        %v881 = vpop.permute.xlu0 %880
        %883 = vset.pattern.permute.xlu0 4
        %884 = vperm.xlu0 %883, %v658
        %v885 = vpop.permute.xlu0 %884
        %887 = vset.pattern.permute.xlu0 4
        %888 = vperm.xlu0 %887, %v659
        %v889 = vpop.permute.xlu0 %888
        %891 = vset.pattern.permute.xlu0 4
        %892 = vperm.xlu0 %891, %v660
        %v893 = vpop.permute.xlu0 %892
        %895 = vset.pattern.permute.xlu0 4
        %896 = vperm.xlu0 %895, %v661
        %v897 = vpop.permute.xlu0 %896
        %899 = vset.pattern.permute.xlu0 4
        %900 = vperm.xlu0 %899, %v662
        %v901 = vpop.permute.xlu0 %900
        %v903 = vlaneseq
        %v904 = vshrl.u32 %v903, 7
        %v905 = vsub.s32 4, %v904
        %v906 = vrot.slane %v654, %v905
        %v907 = vmul.f32 %v873, %v906
        %v908 = vmul.f32 %v877, %v906
        %v909 = vmul.f32 %v881, %v906
        %v910 = vmul.f32 %v885, %v906
        %v911 = vmul.f32 %v889, %v906
        %v912 = vmul.f32 %v893, %v906
        %v913 = vmul.f32 %v897, %v906
        %v914 = vmul.f32 %v901, %v906
        %v915 = vadd.f32 %v863, %v907
        %v916 = vadd.f32 %v864, %v908
        %v917 = vadd.f32 %v865, %v909
        %v918 = vadd.f32 %v866, %v910
        %v919 = vadd.f32 %v867, %v911
        %v920 = vadd.f32 %v868, %v912
        %v921 = vadd.f32 %v869, %v913
        %v922 = vadd.f32 %v870, %v914
        %v923 = vadd.f32 %v642, %v915
        %v924 = vadd.f32 %v643, %v916
        %v925 = vadd.f32 %v644, %v917
        %v926 = vadd.f32 %v645, %v918
        %v927 = vadd.f32 %v646, %v919
        %v928 = vadd.f32 %v647, %v920
        %v929 = vadd.f32 %v648, %v921
        %v930 = vadd.f32 %v649, %v922
        %v932 = vlaneseq
        %v933 = vshrl.u32 %v932, 7
        %v934 = vsub.s32 0, %v933
        %v935 = vrot.slane %v446, %v934
        %v937 = vadd.f32 %v923, %v935
        %v938 = vadd.f32 %v924, %v935
        %v939 = vadd.f32 %v925, %v935
        %v940 = vadd.f32 %v926, %v935
        %v941 = vadd.f32 %v927, %v935
        %v942 = vadd.f32 %v928, %v935
        %v943 = vadd.f32 %v929, %v935
        %v944 = vadd.f32 %v930, %v935
        %v945 = vmax.f32 %v937, 0.0
        %v946 = vmax.f32 %v938, 0.0
        %v947 = vmax.f32 %v939, 0.0
        %v948 = vmax.f32 %v940, 0.0
        %v949 = vmax.f32 %v941, 0.0
        %v950 = vmax.f32 %v942, 0.0
        %v951 = vmax.f32 %v943, 0.0
        %v952 = vmax.f32 %v944, 0.0
        %v953 = vpack.c.bf16 %v946, %v945
        %v954 = vpack.c.bf16 %v948, %v947
        %v955 = vpack.c.bf16 %v950, %v949
        %v956 = vpack.c.bf16 %v952, %v951
        %v958 = vlaneseq
        %v959 = vshrl.u32 %v958, 7
        %v960 = vsub.s32 0, %v959
        %v961 = vrot.slane %v463, %v960
        %v979 = vunpack.c.l.b16 %v447
        %v980 = vunpack.c.l.b16 %v448
        %v981 = vunpack.c.l.b16 %v449
        %v982 = vunpack.c.l.b16 %v450
        %v983 = vunpack.c.l.b16 %v451
        %v984 = vunpack.c.l.b16 %v452
        %v985 = vunpack.c.l.b16 %v453
        %v986 = vunpack.c.l.b16 %v454
        %v987 = vunpack.c.l.b16 %v455
        %v988 = vunpack.c.l.b16 %v456
        %v989 = vunpack.c.l.b16 %v457
        %v990 = vunpack.c.l.b16 %v458
        %v991 = vunpack.c.l.b16 %v459
        %v992 = vunpack.c.l.b16 %v460
        %v993 = vunpack.c.l.b16 %v461
        %v994 = vunpack.c.l.b16 %v462
        %v995 = vpack.c.b16 %v980, %v979
        %v996 = vpack.c.b16 %v982, %v981
        %v997 = vpack.c.b16 %v984, %v983
        %v998 = vpack.c.b16 %v986, %v985
        %v999 = vpack.c.b16 %v988, %v987
        %v1000 = vpack.c.b16 %v990, %v989
        %v1001 = vpack.c.b16 %v992, %v991
        %v1002 = vpack.c.b16 %v994, %v993
        %1011 = vmatprep.subr.bf16.mxu0 0
        %1012 = vmatpush1.bf16.msra.mxu0 %v995
        %1013 = vmatprep.subr.bf16.mxu0 0
        %1014 = vmatpush1.bf16.msra.mxu0 %v996
        %1015 = vmatprep.subr.bf16.mxu0 0
        %1016 = vmatpush1.bf16.msra.mxu0 %v997
        %1017 = vmatprep.subr.bf16.mxu0 0
        %1018 = vmatpush1.bf16.msra.mxu0 %v998
        %1019 = vmatprep.subr.bf16.mxu0 0
        %1020 = vmatpush1.bf16.msra.mxu0 %v999
        %1021 = vmatprep.subr.bf16.mxu0 0
        %1022 = vmatpush1.bf16.msra.mxu0 %v1000
        %1023 = vmatprep.subr.bf16.mxu0 0
        %1024 = vmatpush1.bf16.msra.mxu0 %v1001
        %1025 = vmatprep.subr.bf16.mxu0 0
        %1026 = vmatpush1.bf16.msra.mxu0 %v1002
        %1027 = vmatprep.subr.bf16.mxu0 0
        %1028 = vmatpush1.bf16.msra.mxu0 0
        %1029 = vmatprep.subr.bf16.mxu0 0
        %1030 = vmatpush1.bf16.msra.mxu0 0
        %1031 = vmatprep.subr.bf16.mxu0 0
        %1032 = vmatpush1.bf16.msra.mxu0 0
        %1033 = vmatprep.subr.bf16.mxu0 0
        %1034 = vmatpush1.bf16.msra.mxu0 0
        %1035 = vmatprep.subr.bf16.mxu0 0
        %1036 = vmatpush1.bf16.msra.mxu0 0
        %1037 = vmatprep.subr.bf16.mxu0 0
        %1038 = vmatpush1.bf16.msra.mxu0 0
        %1039 = vmatprep.subr.bf16.mxu0 0
        %1040 = vmatpush1.bf16.msra.mxu0 0
        %1041 = vmatprep.subr.bf16.mxu0 0
        %1042 = vmatpush1.bf16.msra.mxu0 0
        %1043 = vmatprep.mubr.bf16.mxu0 0
        %1044 = vmatmul.mubr.bf16.gmra.mrb[0].mxu0 %v953
        %v1045 = vpop.f32.mrb[0].mxu0
        %v1046 = vadd.f32 %v961, %v1045
        %v1047 = vpop.f32.mrb[0].mxu0
        %v1048 = vpop.f32.mrb[0].mxu0
        %v1049 = vadd.f32 %v961, %v1048
        %v1050 = vpop.f32.mrb[0].mxu0
        %1051 = vmatprep.mubr.bf16.mxu0 0
        %1052 = vmatmul.mubr.bf16.gmra.mrb[0].mxu0 %v954
        %v1053 = vpop.f32.mrb[0].mxu0
        %v1054 = vadd.f32 %v961, %v1053
        %v1055 = vpop.f32.mrb[0].mxu0
        %v1056 = vpop.f32.mrb[0].mxu0
        %v1057 = vadd.f32 %v961, %v1056
        %v1058 = vpop.f32.mrb[0].mxu0
        %1059 = vmatprep.mubr.bf16.mxu0 0
        %1060 = vmatmul.mubr.bf16.gmra.mrb[0].mxu0 %v955
        %v1061 = vpop.f32.mrb[0].mxu0
        %v1062 = vadd.f32 %v961, %v1061
        %v1063 = vpop.f32.mrb[0].mxu0
        %v1064 = vpop.f32.mrb[0].mxu0
        %v1065 = vadd.f32 %v961, %v1064
        %v1066 = vpop.f32.mrb[0].mxu0
        %1067 = vmatprep.mubr.bf16.mxu0 0
        %1068 = vmatmul.mubr.bf16.gmra.mrb[0].mxu0 %v956
        %v1069 = vpop.f32.mrb[0].mxu0
        %v1070 = vadd.f32 %v961, %v1069
        %v1071 = vpop.f32.mrb[0].mxu0
        %v1072 = vpop.f32.mrb[0].mxu0
        %v1073 = vadd.f32 %v961, %v1072
        %v1074 = vpop.f32.mrb[0].mxu0
        %1075 = vdwg.mxu0
        %v1076 = vmax.f32 %v1046, 0.0
        %v1077 = vmax.f32 %v1049, 0.0
        %v1078 = vmax.f32 %v1054, 0.0
        %v1079 = vmax.f32 %v1057, 0.0
        %v1080 = vmax.f32 %v1062, 0.0
        %v1081 = vmax.f32 %v1065, 0.0
        %v1082 = vmax.f32 %v1070, 0.0
        %v1083 = vmax.f32 %v1073, 0.0
        %v1084 = vmax.f32 %v1076, %v1080
        %v1085 = vmax.f32 %v1077, %v1081
        %v1086 = vmax.f32 %v1078, %v1082
        %v1087 = vmax.f32 %v1079, %v1083
        %v1088 = vmax.f32 %v1084, %v1085
        %v1089 = vmax.f32 %v1086, %v1087
        %v1090 = vmax.f32 %v1088, %v1089
        %v1091 = vmax.f32 %v480, %v1090
        %1092 = vst [vmem:[%s435] sm:$0xff] %v1091
        %s1093 = sand.u32 %s223, 1
        %s1094 = scalar_lea.sflag [#allocation4], %s1093
        %s1095 = sand.u32 %s223, 1
        %s1096 = smul.addr %s1095, 8
        %s1097 = scalar_lea.vmem [#allocation14], %s1096
        // Predicated region
        $region81: #{tpu_custom_call.1} parent=47 // pred_check
          %p1098 = pneg %p233
        $region82: #{tpu_custom_call.1} parent=47 // pred_check_branch
          %1100 = sbr.rel (%p1098) target = $region84
        $region83: #{tpu_custom_call.1} parent=47 // pred_region
          %s1102 = ssub.s32 128, 128
          %1103 = vsyncadd %s1094, %s1102
          %s1104 = sadd.s32 %s35, %s34
          %s1105 = smul.addr %s1104, 128
          %s1106 = scalar_lea.hbm %s7, %s1105
          %s1108 = sshll.u32 %s1097, 4
          %s1109 = int_to_ptr.vmem [resolvable:$true] %s1108
          %1111 = dma.vmem_to_hbm [thread:$0]  %s1109, 128, %s1106, %s1094
        $region84: #{tpu_custom_call.1} parent=47 // pred_fallthru
          _
      $region48: #{tpu_custom_call.1} parent=5 // pred_fallthru
        _
      %p1112 = scmp.le.s32.totalorder 2, %s24
      // Predicated region
      $region85: #{tpu_custom_call.1} parent=5 // pred_check
        %p1113 = pneg %p1112
      $region86: #{tpu_custom_call.1} parent=5 // pred_check_branch
        %1115 = sbr.rel (%p1113) target = $region88
      $region87: #{tpu_custom_call.1} parent=5 // pred_region
        %s1116 = ssub.s32 %s24, 2
        // Predicated region
        $region89: #{tpu_custom_call.1} parent=87 // pred_check
          %p1117 = pneg %p239
        $region90: #{tpu_custom_call.1} parent=87 // pred_check_branch
          %1119 = sbr.rel (%p1117) target = $region92
        $region91: #{tpu_custom_call.1} parent=87 // pred_region
          %s1120 = sand.u32 %s224, 1
          %s1121 = scalar_lea.sflag [#allocation4], %s1120
          %s1122 = sand.u32 %s224, 1
          %s1123 = smul.addr %s1122, 8
          %s1124 = scalar_lea.vmem [#allocation14], %s1123
          %1125 = dma.done %s1121, 128
        $region92: #{tpu_custom_call.1} parent=87 // pred_fallthru
          _
      $region88: #{tpu_custom_call.1} parent=5 // pred_fallthru
        _
    $region6: #{tpu_custom_call.1} parent=1 // loop_footer
      %s28 = sadd.s32 1, %s24
    $region7: #{tpu_custom_call.1} parent=1 // loop_footer_branch
      %23 = sbr.rel target = $region3
    $region8: #{tpu_custom_call.1} parent=1 // loop_exit
      _
    %1126 = vsyncpa [#allocation3], 1
    %s1127 = scalar_lea.sflag [#allocation3], 1
    %1128 = vsyncpa %s1127, 1
    %1129 = vsyncpa [#allocation6], 1
    %s1130 = scalar_lea.sflag [#allocation6], 1
    %1131 = vsyncpa %s1130, 1
    %1132 = vsyncpa [#allocation9], 1
    %1133 = vsyncpa [#allocation12], 1
    %1134 = vsyncpa [#allocation4], 1
    %s1135 = scalar_lea.sflag [#allocation4], 1
    %1136 = vsyncpa %s1135, 1

</llo_original>
